<compile_context>
chip_gen: v5e
topology: v5e:2x2
jax: 0.10.0
libtpu: 0.0.40
codegen_flags: <defaults>
</compile_context>

<pallas_src>
import jax
import jax.numpy as jnp
from jax.experimental import pallas as pl
from jax.experimental.pallas import tpu as pltpu


# ----------------------------- fused Pallas kernel -------------------------

def _icm_fused_kernel(x_ref,      # (2B, in_flat) bf16 : [state rows ; next_state rows]
                      act_ref,    # (B, 1) int32       : action ids
                      few_ref,    # (in_flat, F) bf16  : feature-extractor weight
                      w1_ref,     # (3F + A, H) bf16   : [inv_w1 (2F rows) ; fwd_w1 (F+A rows)]
                      w2_ref,     # (H, F + A) bf16    : [fwd_w2 | inv_w2] along lanes
                      b_ref,      # (8, H) f32         : packed bias rows
                      out_ref):   # (B, OUT_W) f32     : lane-dense output slab
    f32 = jnp.float32
    bf16 = jnp.bfloat16

    B2 = x_ref.shape[0]
    B = B2 // 2
    F = few_ref.shape[1]
    H = w1_ref.shape[1]
    A = w2_ref.shape[1] - F
    pred_off = ((A + 127) // 128) * 128     # logits live in cols [0, A); pred_next after
    phin_off = pred_off + F

    bias = b_ref[...]                       # (8, H) f32, single vreg-row load
    fe_b = bias[0:1, 0:F]
    ib1 = bias[1:2, 0:H]
    ib2 = bias[2:3, 0:A]
    fb1 = bias[3:4, 0:H]
    fb2 = bias[4:5, 0:F]

    # --- Feature extractor: ONE matmul over stacked (2B) rows, fe_w pushed once ---
    feats = jnp.maximum(
        jnp.dot(x_ref[...], few_ref[...], preferred_element_type=f32) + fe_b, 0.0)
    phi = feats[0:B]                        # (B, F) f32
    phi_next = feats[B:2 * B]               # (B, F) f32
    phi16 = phi.astype(bf16)
    phi_next16 = phi_next.astype(bf16)

    # --- Inverse model layer 1: cat(phi, phi_next) @ W1 == phi@W1[:F] + phi_next@W1[F:2F] ---
    h_inv = jnp.maximum(
        jnp.dot(phi16, w1_ref[0:F, :], preferred_element_type=f32)
        + jnp.dot(phi_next16, w1_ref[F:2 * F, :], preferred_element_type=f32)
        + ib1, 0.0)

    # --- Forward model layer 1: cat(phi_next, one_hot(a)) @ W1 ---
    # one_hot built from the (B,1) action tile, applied as a tiny MXU dot (O(1) in B).
    onehot = (jax.lax.broadcasted_iota(jnp.int32, (B, A), 1)
              == act_ref[...]).astype(bf16)                     # (B, A)
    h_fwd = jnp.maximum(
        jnp.dot(phi_next16, w1_ref[2 * F:3 * F, :], preferred_element_type=f32)
        + jnp.dot(onehot, w1_ref[3 * F:3 * F + A, :], preferred_element_type=f32)
        + fb1, 0.0)

    # --- Both second layers in ONE dot: stack h_inv/h_fwd along sublanes, hit the
    #     packed [fwd_w2 | inv_w2] slab once; extra M rows / cross terms are free. ---
    h_all = jnp.concatenate([h_inv, h_fwd], axis=0).astype(bf16)      # (2B, H)
    res = jnp.dot(h_all, w2_ref[...], preferred_element_type=f32)     # (2B, F + A)
    logits = res[0:B, F:F + A] + ib2                                  # h_inv @ inv_w2
    pred_next = res[B:2 * B, 0:F] + fb2                               # h_fwd @ fwd_w2

    # --- Single lane-dense output slab: one HBM writeback DMA; wrapper slices views ---
    out_ref[:, 0:A] = logits.astype(out_ref.dtype)
    out_ref[:, pred_off:pred_off + F] = pred_next.astype(out_ref.dtype)
    out_ref[:, phin_off:phin_off + F] = phi_next.astype(out_ref.dtype)


# ------------------------------- ICM module --------------------------------

class IntrinsicCuriosityModulePallas:
    """JAX/Pallas re-implementation of the PyTorch IntrinsicCuriosityModule."""

    def __init__(self, num_actions, input_shape, feat_dim=32, hidden=256, seed=0):
        self.num_actions = num_actions
        self.input_shape = input_shape          # (C, H, W)
        self.feat_dim = feat_dim
        self.hidden = hidden
        c, h, w = input_shape
        in_flat = c * h * w

        assert num_actions <= 128 and feat_dim <= hidden and num_actions <= hidden
        # Output-slab column layout (lane-dense, 128-aligned segments).
        self.pred_off = ((num_actions + 127) // 128) * 128
        self.phin_off = self.pred_off + feat_dim
        self.out_width = ((self.phin_off + feat_dim + 127) // 128) * 128

        key = jax.random.PRNGKey(seed)
        ks = jax.random.split(key, 10)

        def uinit(k, shape, fan_in):
            bound = 1.0 / jnp.sqrt(jnp.float32(fan_in))
            return jax.random.uniform(k, shape, jnp.float32, -bound, bound)

        # feature extractor: Flatten -> Linear(in_flat, feat_dim) -> ReLU
        fe_w = uinit(ks[0], (in_flat, feat_dim), in_flat)
        fe_b = uinit(ks[1], (feat_dim,), in_flat)

        # inverse model: Linear(2F, hidden) -> ReLU -> Linear(hidden, A)
        inv_w1 = uinit(ks[2], (2 * feat_dim, hidden), 2 * feat_dim)
        inv_b1 = uinit(ks[3], (hidden,), 2 * feat_dim)
        inv_w2 = uinit(ks[4], (hidden, num_actions), hidden)
        inv_b2 = uinit(ks[5], (num_actions,), hidden)

        # forward model: Linear(F + A, hidden) -> ReLU -> Linear(hidden, F)
        fwd_w1 = uinit(ks[6], (feat_dim + num_actions, hidden), feat_dim + num_actions)
        fwd_b1 = uinit(ks[7], (hidden,), feat_dim + num_actions)
        fwd_w2 = uinit(ks[8], (hidden, feat_dim), hidden)
        fwd_b2 = uinit(ks[9], (feat_dim,), hidden)

        # bf16 weight storage (native MXU dtype; dots accumulate in f32).
        self.fe_w = fe_w.astype(jnp.bfloat16)                               # (in_flat, F)
        # Packed W1 slab: rows [0:2F) = inv_w1, rows [2F:3F+A) = fwd_w1.
        self.w1_slab = jnp.concatenate([inv_w1, fwd_w1], axis=0).astype(jnp.bfloat16)
        # Packed W2 slab: cols [0:F) = fwd_w2, cols [F:F+A) = inv_w2 (no 128-padding in HBM).
        self.w2_slab = jnp.concatenate([fwd_w2, inv_w2], axis=1).astype(jnp.bfloat16)
        # Packed bias slab (f32, one small DMA / one vreg load).
        bias_slab = jnp.zeros((8, hidden), jnp.float32)
        bias_slab = bias_slab.at[0, :feat_dim].set(fe_b)
        bias_slab = bias_slab.at[1, :hidden].set(inv_b1)
        bias_slab = bias_slab.at[2, :num_actions].set(inv_b2)
        bias_slab = bias_slab.at[3, :hidden].set(fwd_b1)
        bias_slab = bias_slab.at[4, :feat_dim].set(fwd_b2)
        self.bias_slab = bias_slab

    def __call__(self, state, next_state, action):
        # state, next_state: (B, C, H, W) float32 ; action: (B,) int
        B = state.shape[0]
        s_flat = state.reshape(B, -1)                 # NCHW row-major flatten == torch.flatten
        ns_flat = next_state.reshape(B, -1)
        # Stack rows so the feature extractor is one matmul over (2B, in_flat).
        x_stacked = jnp.concatenate([s_flat, ns_flat], axis=0).astype(jnp.bfloat16)
        act2d = action.reshape(B, 1).astype(jnp.int32)

        vmem = pl.BlockSpec(memory_space=pltpu.MemorySpace.VMEM)

        # TODO(synk): at realistic batch sizes (B >= 128), add a batch grid axis with
        # dimension_semantics=("parallel",) so v7x's two TensorCores both work, and
        # tile the feature-extractor K dimension ("arbitrary", f32 accumulator scratch)
        # once in_flat/hidden grow beyond whole-weights-in-VMEM territory.
        out = pl.pallas_call(
            _icm_fused_kernel,
            out_shape=jax.ShapeDtypeStruct((B, self.out_width), jnp.float32),
            in_specs=[vmem] * 6,
            out_specs=vmem,
        )(x_stacked, act2d, self.fe_w, self.w1_slab, self.w2_slab, self.bias_slab)

        action_pred = out[:, :self.num_actions]
        predicted_next_state = out[:, self.pred_off:self.pred_off + self.feat_dim]
        phi_next = out[:, self.phin_off:self.phin_off + self.feat_dim]
        return action_pred, predicted_next_state, phi_next


# ---------------------------------- main ------------------------------------

if __name__ == "__main__":
    B, C, H, W = 2, 4, 16, 16
    NUM_ACTIONS = 6
    FEAT_DIM = 32

    key = jax.random.PRNGKey(0)
    k_s, k_ns, k_a = jax.random.split(key, 3)
    state = jax.random.normal(k_s, (B, C, H, W), dtype=jnp.float32)
    next_state = jax.random.normal(k_ns, (B, C, H, W), dtype=jnp.float32)
    action = jax.random.randint(k_a, (B,), 0, NUM_ACTIONS, dtype=jnp.int32)

    icm = IntrinsicCuriosityModulePallas(num_actions=NUM_ACTIONS,
                                         input_shape=(C, H, W),
                                         feat_dim=FEAT_DIM,
                                         seed=0)

    action_pred, predicted_next_state, phi_next = icm(state, next_state, action)
    jax.block_until_ready((action_pred, predicted_next_state, phi_next))

    assert action_pred.shape == (B, NUM_ACTIONS)
    assert predicted_next_state.shape == (B, FEAT_DIM)
    assert phi_next.shape == (B, FEAT_DIM)

    print("KERNEL_OK")
</pallas_src>

<mosaic_0001>
module attributes {stable_mosaic.version = 11 : i64} {
  func.func @_icm_fused_kernel(%arg0: memref<4x1024xbf16, #tpu.memory_space<vmem>>, %arg1: memref<2x1xi32, #tpu.memory_space<vmem>>, %arg2: memref<1024x32xbf16, #tpu.memory_space<vmem>>, %arg3: memref<102x256xbf16, #tpu.memory_space<vmem>>, %arg4: memref<256x38xbf16, #tpu.memory_space<vmem>>, %arg5: memref<8x256xf32, #tpu.memory_space<vmem>>, %arg6: memref<2x256xf32, #tpu.memory_space<vmem>>) attributes {dimension_semantics = [], scalar_prefetch = 0 : i64, scratch_operands = 0 : i64, tpu.core_type = #tpu.core_type<tc>} {
    %c0 = arith.constant 0 : index
    %c0_0 = arith.constant 0 : index
    %0 = vector.load %arg5[%c0, %c0_0] : memref<8x256xf32, #tpu.memory_space<vmem>>, vector<8x256xf32>
    %1 = vector.extract_strided_slice %0 {offsets = [0, 0], sizes = [1, 32], strides = [1, 1]} : vector<8x256xf32> to vector<1x32xf32>
    %2 = vector.extract_strided_slice %0 {offsets = [1, 0], sizes = [1, 256], strides = [1, 1]} : vector<8x256xf32> to vector<1x256xf32>
    %3 = vector.extract_strided_slice %0 {offsets = [2, 0], sizes = [1, 6], strides = [1, 1]} : vector<8x256xf32> to vector<1x6xf32>
    %4 = vector.extract_strided_slice %0 {offsets = [3, 0], sizes = [1, 256], strides = [1, 1]} : vector<8x256xf32> to vector<1x256xf32>
    %5 = vector.extract_strided_slice %0 {offsets = [4, 0], sizes = [1, 32], strides = [1, 1]} : vector<8x256xf32> to vector<1x32xf32>
    %c0_1 = arith.constant 0 : index
    %c0_2 = arith.constant 0 : index
    %6 = vector.load %arg0[%c0_1, %c0_2] : memref<4x1024xbf16, #tpu.memory_space<vmem>>, vector<4x1024xbf16>
    %c0_3 = arith.constant 0 : index
    %c0_4 = arith.constant 0 : index
    %7 = vector.load %arg2[%c0_3, %c0_4] : memref<1024x32xbf16, #tpu.memory_space<vmem>>, vector<1024x32xbf16>
    %cst = arith.constant dense<0.000000e+00> : vector<4x32xf32>
    %8 = tpu.matmul %6, %7, %cst {dimension_numbers = #tpu.dot_dimension_numbers<[1], [0], [0], [1], [0, 0, 1, 1], [], []>} : vector<4x1024xbf16>, vector<1024x32xbf16>, vector<4x32xf32> -> vector<4x32xf32>
    %9 = vector.broadcast %1 : vector<1x32xf32> to vector<4x32xf32>
    %10 = arith.addf %8, %9 : vector<4x32xf32>
    %cst_5 = arith.constant 0.000000e+00 : f32
    %11 = vector.broadcast %cst_5 : f32 to vector<4x32xf32>
    %12 = arith.maximumf %10, %11 : vector<4x32xf32>
    %13 = vector.extract_strided_slice %12 {offsets = [0, 0], sizes = [2, 32], strides = [1, 1]} : vector<4x32xf32> to vector<2x32xf32>
    %14 = vector.extract_strided_slice %12 {offsets = [2, 0], sizes = [2, 32], strides = [1, 1]} : vector<4x32xf32> to vector<2x32xf32>
    %15 = arith.truncf %13 : vector<2x32xf32> to vector<2x32xbf16>
    %16 = arith.truncf %14 : vector<2x32xf32> to vector<2x32xbf16>
    %c0_6 = arith.constant 0 : index
    %c0_7 = arith.constant 0 : index
    %17 = vector.load %arg3[%c0_6, %c0_7] : memref<102x256xbf16, #tpu.memory_space<vmem>>, vector<32x256xbf16>
    %cst_8 = arith.constant dense<0.000000e+00> : vector<2x256xf32>
    %18 = tpu.matmul %15, %17, %cst_8 {dimension_numbers = #tpu.dot_dimension_numbers<[1], [0], [0], [1], [0, 0, 1, 1], [], []>} : vector<2x32xbf16>, vector<32x256xbf16>, vector<2x256xf32> -> vector<2x256xf32>
    %c32 = arith.constant 32 : index
    %c0_9 = arith.constant 0 : index
    %19 = vector.load %arg3[%c32, %c0_9] : memref<102x256xbf16, #tpu.memory_space<vmem>>, vector<32x256xbf16>
    %cst_10 = arith.constant dense<0.000000e+00> : vector<2x256xf32>
    %20 = tpu.matmul %16, %19, %cst_10 {dimension_numbers = #tpu.dot_dimension_numbers<[1], [0], [0], [1], [0, 0, 1, 1], [], []>} : vector<2x32xbf16>, vector<32x256xbf16>, vector<2x256xf32> -> vector<2x256xf32>
    %21 = arith.addf %18, %20 : vector<2x256xf32>
    %22 = vector.broadcast %2 : vector<1x256xf32> to vector<2x256xf32>
    %23 = arith.addf %21, %22 : vector<2x256xf32>
    %cst_11 = arith.constant 0.000000e+00 : f32
    %24 = vector.broadcast %cst_11 : f32 to vector<2x256xf32>
    %25 = arith.maximumf %23, %24 : vector<2x256xf32>
    %26 = tpu.iota {dimensions = array<i32: 1>} : vector<2x6xi32>
    %c0_12 = arith.constant 0 : index
    %c0_13 = arith.constant 0 : index
    %27 = vector.load %arg1[%c0_12, %c0_13] : memref<2x1xi32, #tpu.memory_space<vmem>>, vector<2x1xi32>
    %28 = vector.broadcast %27 : vector<2x1xi32> to vector<2x6xi32>
    %29 = arith.cmpi eq, %26, %28 : vector<2x6xi32>
    %30 = arith.extui %29 : vector<2x6xi1> to vector<2x6xi32>
    %31 = arith.sitofp %30 : vector<2x6xi32> to vector<2x6xf32>
    %32 = arith.truncf %31 : vector<2x6xf32> to vector<2x6xbf16>
    %c64 = arith.constant 64 : index
    %c0_14 = arith.constant 0 : index
    %33 = vector.load %arg3[%c64, %c0_14] : memref<102x256xbf16, #tpu.memory_space<vmem>>, vector<32x256xbf16>
    %cst_15 = arith.constant dense<0.000000e+00> : vector<2x256xf32>
    %34 = tpu.matmul %16, %33, %cst_15 {dimension_numbers = #tpu.dot_dimension_numbers<[1], [0], [0], [1], [0, 0, 1, 1], [], []>} : vector<2x32xbf16>, vector<32x256xbf16>, vector<2x256xf32> -> vector<2x256xf32>
    %c96 = arith.constant 96 : index
    %c0_16 = arith.constant 0 : index
    %35 = vector.load %arg3[%c96, %c0_16] : memref<102x256xbf16, #tpu.memory_space<vmem>>, vector<6x256xbf16>
    %cst_17 = arith.constant dense<0.000000e+00> : vector<2x256xf32>
    %36 = tpu.matmul %32, %35, %cst_17 {dimension_numbers = #tpu.dot_dimension_numbers<[1], [0], [0], [1], [0, 0, 1, 1], [], []>} : vector<2x6xbf16>, vector<6x256xbf16>, vector<2x256xf32> -> vector<2x256xf32>
    %37 = arith.addf %34, %36 : vector<2x256xf32>
    %38 = vector.broadcast %4 : vector<1x256xf32> to vector<2x256xf32>
    %39 = arith.addf %37, %38 : vector<2x256xf32>
    %cst_18 = arith.constant 0.000000e+00 : f32
    %40 = vector.broadcast %cst_18 : f32 to vector<2x256xf32>
    %41 = arith.maximumf %39, %40 : vector<2x256xf32>
    %42 = tpu.concatenate %25, %41 in 0 : vector<2x256xf32>, vector<2x256xf32> -> vector<4x256xf32>
    %43 = arith.truncf %42 : vector<4x256xf32> to vector<4x256xbf16>
    %c0_19 = arith.constant 0 : index
    %c0_20 = arith.constant 0 : index
    %44 = vector.load %arg4[%c0_19, %c0_20] : memref<256x38xbf16, #tpu.memory_space<vmem>>, vector<256x38xbf16>
    %cst_21 = arith.constant dense<0.000000e+00> : vector<4x38xf32>
    %45 = tpu.matmul %43, %44, %cst_21 {dimension_numbers = #tpu.dot_dimension_numbers<[1], [0], [0], [1], [0, 0, 1, 1], [], []>} : vector<4x256xbf16>, vector<256x38xbf16>, vector<4x38xf32> -> vector<4x38xf32>
    %46 = vector.extract_strided_slice %45 {offsets = [0, 32], sizes = [2, 6], strides = [1, 1]} : vector<4x38xf32> to vector<2x6xf32>
    %47 = vector.broadcast %3 : vector<1x6xf32> to vector<2x6xf32>
    %48 = arith.addf %46, %47 : vector<2x6xf32>
    %49 = vector.extract_strided_slice %45 {offsets = [2, 0], sizes = [2, 32], strides = [1, 1]} : vector<4x38xf32> to vector<2x32xf32>
    %50 = vector.broadcast %5 : vector<1x32xf32> to vector<2x32xf32>
    %51 = arith.addf %49, %50 : vector<2x32xf32>
    %c0_22 = arith.constant 0 : index
    %c0_23 = arith.constant 0 : index
    %52 = vector.load %arg6[%c0_22, %c0_23] : memref<2x256xf32, #tpu.memory_space<vmem>>, vector<2x6xf32>
    tpu.vector_store %arg6[%c0_22, %c0_23], %48 {strides = array<i32>} : memref<2x256xf32, #tpu.memory_space<vmem>>, vector<2x6xf32>,
    %c0_24 = arith.constant 0 : index
    %c128 = arith.constant 128 : index
    %53 = vector.load %arg6[%c0_24, %c128] : memref<2x256xf32, #tpu.memory_space<vmem>>, vector<2x32xf32>
    tpu.vector_store %arg6[%c0_24, %c128], %51 {strides = array<i32>} : memref<2x256xf32, #tpu.memory_space<vmem>>, vector<2x32xf32>,
    %c0_25 = arith.constant 0 : index
    %c160 = arith.constant 160 : index
    %54 = vector.load %arg6[%c0_25, %c160] : memref<2x256xf32, #tpu.memory_space<vmem>>, vector<2x32xf32>
    tpu.vector_store %arg6[%c0_25, %c160], %14 {strides = array<i32>} : memref<2x256xf32, #tpu.memory_space<vmem>>, vector<2x32xf32>,
    return
  }
}

</mosaic_0001>

<llo_original>
// kernel: tpu_custom_call.1
$region0: #{tpu_custom_call.1}
  #allocation0 [shape = 'u32[]', space=smem, size = 0x4, offset = 0x4, fixed_abs, tag = 'smem constant byte address 0x4 - core index']
  #allocation1 [shape = 'u32[72,128]{1,0:T(1,128)}', space=vmem, size = 0x9000, scoped, tag = 'internal scratch']
  %s0 = inlined_call_operand.vmem [shape: bf16[4,1024], index: 0, kind: input, shape index: {}]
  %s1 = inlined_call_operand.vmem [shape: s32[2,1], index: 1, kind: input, shape index: {}]
  %s2 = inlined_call_operand.vmem [shape: bf16[1024,32], index: 2, kind: input, shape index: {}]
  %s3 = inlined_call_operand.vmem [shape: bf16[102,256], index: 3, kind: input, shape index: {}]
  %s4 = inlined_call_operand.vmem [shape: bf16[256,38], index: 4, kind: input, shape index: {}]
  %s5 = inlined_call_operand.vmem [shape: f32[8,256], index: 5, kind: input, shape index: {}]
  %s6 = inlined_call_operand.hbm [shape: f32[2,256], index: 6, kind: output, shape index: {}]
  %s7 = sld [smem:[#allocation0]]
  $region34: #{tpu_custom_call.1} parent=0
    _
  %s9 = ssub.s32 1, %s7
  %s10 = scalar_select 0, %s9, %s7
  $region1: #{tpu_custom_call.1} parent=0
    #allocation2 [shape = 'u8[2048]{0}', space=vmem, size = 0x800, scoped, tag = 'output window, operand 0, single buffered']
    #allocation3 [shape = 's32[1]{0}', space=sflag, size = 0x4, scoped, tag = 'scoped memory for tpu_custom_call.1']
    %11 = vsyncpa [#allocation3], 0
    // Predicated region
    $region2: #{tpu_custom_call.1} parent=1 // pred_check
      _
    $region3: #{tpu_custom_call.1} parent=1 // pred_check_branch
      %13 = sbr.rel (0) target = $region5
    $region4: #{tpu_custom_call.1} parent=1 // pred_region
      _
    $region5: #{tpu_custom_call.1} parent=1 // pred_fallthru
      _
    // Predicated region
    $region6: #{tpu_custom_call.1} parent=1 // pred_check
      _
    $region7: #{tpu_custom_call.1} parent=1 // pred_check_branch
      %15 = sbr.rel (0) target = $region9
    $region8: #{tpu_custom_call.1} parent=1 // pred_region
      _
    $region9: #{tpu_custom_call.1} parent=1 // pred_fallthru
      _
    // Predicated region
    $region10: #{tpu_custom_call.1} parent=1 // pred_check
      _
    $region11: #{tpu_custom_call.1} parent=1 // pred_check_branch
      %17 = sbr.rel (0) target = $region13
    $region12: #{tpu_custom_call.1} parent=1 // pred_region
      _
    $region13: #{tpu_custom_call.1} parent=1 // pred_fallthru
      _
    // Predicated region
    $region14: #{tpu_custom_call.1} parent=1 // pred_check
      _
    $region15: #{tpu_custom_call.1} parent=1 // pred_check_branch
      %19 = sbr.rel (0) target = $region17
    $region16: #{tpu_custom_call.1} parent=1 // pred_region
      _
    $region17: #{tpu_custom_call.1} parent=1 // pred_fallthru
      _
    // Predicated region
    $region18: #{tpu_custom_call.1} parent=1 // pred_check
      _
    $region19: #{tpu_custom_call.1} parent=1 // pred_check_branch
      %21 = sbr.rel (0) target = $region21
    $region20: #{tpu_custom_call.1} parent=1 // pred_region
      _
    $region21: #{tpu_custom_call.1} parent=1 // pred_fallthru
      _
    // Predicated region
    $region22: #{tpu_custom_call.1} parent=1 // pred_check
      _
    $region23: #{tpu_custom_call.1} parent=1 // pred_check_branch
      %23 = sbr.rel (0) target = $region25
    $region24: #{tpu_custom_call.1} parent=1 // pred_region
      _
    $region25: #{tpu_custom_call.1} parent=1 // pred_fallthru
      _
    %v25 = vld [vmem:[%s5] sm:$0xff]
    %v26 = vld [vmem:[%s5 + $0x8] sm:$0xff]
    %v27 = vld [vmem:[%s0] sm:$0xff]
    %v28 = vld [vmem:[%s0 + $0x8] sm:$0xff]
    %v29 = vld [vmem:[%s2] sm:$0xf]
    %v30 = vld [vmem:[%s2 + $0x4] sm:$0xf]
    %v31 = vld [vmem:[%s2 + $0x8] sm:$0xf]
    %v32 = vld [vmem:[%s2 + $0xc] sm:$0xf]
    %v33 = vld [vmem:[%s2 + $0x10] sm:$0xf]
    %v34 = vld [vmem:[%s2 + $0x14] sm:$0xf]
    %v35 = vld [vmem:[%s2 + $0x18] sm:$0xf]
    %v36 = vld [vmem:[%s2 + $0x1c] sm:$0xf]
    %v37 = vld [vmem:[%s2 + $0x20] sm:$0xf]
    %v38 = vld [vmem:[%s2 + $0x24] sm:$0xf]
    %v39 = vld [vmem:[%s2 + $0x28] sm:$0xf]
    %v40 = vld [vmem:[%s2 + $0x2c] sm:$0xf]
    %v41 = vld [vmem:[%s2 + $0x30] sm:$0xf]
    %v42 = vld [vmem:[%s2 + $0x34] sm:$0xf]
    %v43 = vld [vmem:[%s2 + $0x38] sm:$0xf]
    %v44 = vld [vmem:[%s2 + $0x3c] sm:$0xf]
    %v45 = vld [vmem:[%s2 + $0x40] sm:$0xf]
    %v46 = vld [vmem:[%s2 + $0x44] sm:$0xf]
    %v47 = vld [vmem:[%s2 + $0x48] sm:$0xf]
    %v48 = vld [vmem:[%s2 + $0x4c] sm:$0xf]
    %v49 = vld [vmem:[%s2 + $0x50] sm:$0xf]
    %v50 = vld [vmem:[%s2 + $0x54] sm:$0xf]
    %v51 = vld [vmem:[%s2 + $0x58] sm:$0xf]
    %v52 = vld [vmem:[%s2 + $0x5c] sm:$0xf]
    %v53 = vld [vmem:[%s2 + $0x60] sm:$0xf]
    %v54 = vld [vmem:[%s2 + $0x64] sm:$0xf]
    %v55 = vld [vmem:[%s2 + $0x68] sm:$0xf]
    %v56 = vld [vmem:[%s2 + $0x6c] sm:$0xf]
    %v57 = vld [vmem:[%s2 + $0x70] sm:$0xf]
    %v58 = vld [vmem:[%s2 + $0x74] sm:$0xf]
    %v59 = vld [vmem:[%s2 + $0x78] sm:$0xf]
    %v60 = vld [vmem:[%s2 + $0x7c] sm:$0xf]
    %v61 = vld [vmem:[%s2 + $0x80] sm:$0xf]
    %v62 = vld [vmem:[%s2 + $0x84] sm:$0xf]
    %v63 = vld [vmem:[%s2 + $0x88] sm:$0xf]
    %v64 = vld [vmem:[%s2 + $0x8c] sm:$0xf]
    %v65 = vld [vmem:[%s2 + $0x90] sm:$0xf]
    %v66 = vld [vmem:[%s2 + $0x94] sm:$0xf]
    %v67 = vld [vmem:[%s2 + $0x98] sm:$0xf]
    %v68 = vld [vmem:[%s2 + $0x9c] sm:$0xf]
    %v69 = vld [vmem:[%s2 + $0xa0] sm:$0xf]
    %v70 = vld [vmem:[%s2 + $0xa4] sm:$0xf]
    %v71 = vld [vmem:[%s2 + $0xa8] sm:$0xf]
    %v72 = vld [vmem:[%s2 + $0xac] sm:$0xf]
    %v73 = vld [vmem:[%s2 + $0xb0] sm:$0xf]
    %v74 = vld [vmem:[%s2 + $0xb4] sm:$0xf]
    %v75 = vld [vmem:[%s2 + $0xb8] sm:$0xf]
    %v76 = vld [vmem:[%s2 + $0xbc] sm:$0xf]
    %v77 = vld [vmem:[%s2 + $0xc0] sm:$0xf]
    %v78 = vld [vmem:[%s2 + $0xc4] sm:$0xf]
    %v79 = vld [vmem:[%s2 + $0xc8] sm:$0xf]
    %v80 = vld [vmem:[%s2 + $0xcc] sm:$0xf]
    %v81 = vld [vmem:[%s2 + $0xd0] sm:$0xf]
    %v82 = vld [vmem:[%s2 + $0xd4] sm:$0xf]
    %v83 = vld [vmem:[%s2 + $0xd8] sm:$0xf]
    %v84 = vld [vmem:[%s2 + $0xdc] sm:$0xf]
    %v85 = vld [vmem:[%s2 + $0xe0] sm:$0xf]
    %v86 = vld [vmem:[%s2 + $0xe4] sm:$0xf]
    %v87 = vld [vmem:[%s2 + $0xe8] sm:$0xf]
    %v88 = vld [vmem:[%s2 + $0xec] sm:$0xf]
    %v89 = vld [vmem:[%s2 + $0xf0] sm:$0xf]
    %v90 = vld [vmem:[%s2 + $0xf4] sm:$0xf]
    %v91 = vld [vmem:[%s2 + $0xf8] sm:$0xf]
    %v92 = vld [vmem:[%s2 + $0xfc] sm:$0xf]
    %v93 = vld [vmem:[%s2 + $0x100] sm:$0xf]
    %v94 = vld [vmem:[%s2 + $0x104] sm:$0xf]
    %v95 = vld [vmem:[%s2 + $0x108] sm:$0xf]
    %v96 = vld [vmem:[%s2 + $0x10c] sm:$0xf]
    %v97 = vld [vmem:[%s2 + $0x110] sm:$0xf]
    %v98 = vld [vmem:[%s2 + $0x114] sm:$0xf]
    %v99 = vld [vmem:[%s2 + $0x118] sm:$0xf]
    %v100 = vld [vmem:[%s2 + $0x11c] sm:$0xf]
    %v101 = vld [vmem:[%s2 + $0x120] sm:$0xf]
    %v102 = vld [vmem:[%s2 + $0x124] sm:$0xf]
    %v103 = vld [vmem:[%s2 + $0x128] sm:$0xf]
    %v104 = vld [vmem:[%s2 + $0x12c] sm:$0xf]
    %v105 = vld [vmem:[%s2 + $0x130] sm:$0xf]
    %v106 = vld [vmem:[%s2 + $0x134] sm:$0xf]
    %v107 = vld [vmem:[%s2 + $0x138] sm:$0xf]
    %v108 = vld [vmem:[%s2 + $0x13c] sm:$0xf]
    %v109 = vld [vmem:[%s2 + $0x140] sm:$0xf]
    %v110 = vld [vmem:[%s2 + $0x144] sm:$0xf]
    %v111 = vld [vmem:[%s2 + $0x148] sm:$0xf]
    %v112 = vld [vmem:[%s2 + $0x14c] sm:$0xf]
    %v113 = vld [vmem:[%s2 + $0x150] sm:$0xf]
    %v114 = vld [vmem:[%s2 + $0x154] sm:$0xf]
    %v115 = vld [vmem:[%s2 + $0x158] sm:$0xf]
    %v116 = vld [vmem:[%s2 + $0x15c] sm:$0xf]
    %v117 = vld [vmem:[%s2 + $0x160] sm:$0xf]
    %v118 = vld [vmem:[%s2 + $0x164] sm:$0xf]
    %v119 = vld [vmem:[%s2 + $0x168] sm:$0xf]
    %v120 = vld [vmem:[%s2 + $0x16c] sm:$0xf]
    %v121 = vld [vmem:[%s2 + $0x170] sm:$0xf]
    %v122 = vld [vmem:[%s2 + $0x174] sm:$0xf]
    %v123 = vld [vmem:[%s2 + $0x178] sm:$0xf]
    %v124 = vld [vmem:[%s2 + $0x17c] sm:$0xf]
    %v125 = vld [vmem:[%s2 + $0x180] sm:$0xf]
    %v126 = vld [vmem:[%s2 + $0x184] sm:$0xf]
    %v127 = vld [vmem:[%s2 + $0x188] sm:$0xf]
    %v128 = vld [vmem:[%s2 + $0x18c] sm:$0xf]
    %v129 = vld [vmem:[%s2 + $0x190] sm:$0xf]
    %v130 = vld [vmem:[%s2 + $0x194] sm:$0xf]
    %v131 = vld [vmem:[%s2 + $0x198] sm:$0xf]
    %v132 = vld [vmem:[%s2 + $0x19c] sm:$0xf]
    %v133 = vld [vmem:[%s2 + $0x1a0] sm:$0xf]
    %v134 = vld [vmem:[%s2 + $0x1a4] sm:$0xf]
    %v135 = vld [vmem:[%s2 + $0x1a8] sm:$0xf]
    %v136 = vld [vmem:[%s2 + $0x1ac] sm:$0xf]
    %v137 = vld [vmem:[%s2 + $0x1b0] sm:$0xf]
    %v138 = vld [vmem:[%s2 + $0x1b4] sm:$0xf]
    %v139 = vld [vmem:[%s2 + $0x1b8] sm:$0xf]
    %v140 = vld [vmem:[%s2 + $0x1bc] sm:$0xf]
    %v141 = vld [vmem:[%s2 + $0x1c0] sm:$0xf]
    %v142 = vld [vmem:[%s2 + $0x1c4] sm:$0xf]
    %v143 = vld [vmem:[%s2 + $0x1c8] sm:$0xf]
    %v144 = vld [vmem:[%s2 + $0x1cc] sm:$0xf]
    %v145 = vld [vmem:[%s2 + $0x1d0] sm:$0xf]
    %v146 = vld [vmem:[%s2 + $0x1d4] sm:$0xf]
    %v147 = vld [vmem:[%s2 + $0x1d8] sm:$0xf]
    %v148 = vld [vmem:[%s2 + $0x1dc] sm:$0xf]
    %v149 = vld [vmem:[%s2 + $0x1e0] sm:$0xf]
    %v150 = vld [vmem:[%s2 + $0x1e4] sm:$0xf]
    %v151 = vld [vmem:[%s2 + $0x1e8] sm:$0xf]
    %v152 = vld [vmem:[%s2 + $0x1ec] sm:$0xf]
    %v153 = vld [vmem:[%s2 + $0x1f0] sm:$0xf]
    %v154 = vld [vmem:[%s2 + $0x1f4] sm:$0xf]
    %v155 = vld [vmem:[%s2 + $0x1f8] sm:$0xf]
    %v156 = vld [vmem:[%s2 + $0x1fc] sm:$0xf]
    %v157 = vperm.slane %v25, 0
    %159 = vst [vmem:[#allocation1] ss:$4 sm:$0xff] %v27
    %s161 = scalar_lea.vmem [#allocation1], 32
    %162 = vst [vmem:[%s161] ss:$4 sm:$0xff] %v28
    %v163 = vld.sshfl [vmem:[#allocation1] sm:$0xff pattern:$0x73625140]
    %v164 = vld.sshfl [vmem:[#allocation1 + $0x8] sm:$0xff pattern:$0x73625140]
    %v165 = vld.sshfl [vmem:[#allocation1 + $0x10] sm:$0xff pattern:$0x73625140]
    %v166 = vld.sshfl [vmem:[#allocation1 + $0x18] sm:$0xff pattern:$0x73625140]
    %v167 = vld.sshfl [vmem:[#allocation1 + $0x20] sm:$0xff pattern:$0x73625140]
    %v168 = vld.sshfl [vmem:[#allocation1 + $0x28] sm:$0xff pattern:$0x73625140]
    %v169 = vld.sshfl [vmem:[#allocation1 + $0x30] sm:$0xff pattern:$0x73625140]
    %v170 = vld.sshfl [vmem:[#allocation1 + $0x38] sm:$0xff pattern:$0x73625140]
    %v307 = vunpack.c.l.b16 %v29
    %v308 = vunpack.c.l.b16 %v30
    %v309 = vunpack.c.l.b16 %v31
    %v310 = vunpack.c.l.b16 %v32
    %v311 = vunpack.c.l.b16 %v33
    %v312 = vunpack.c.l.b16 %v34
    %v313 = vunpack.c.l.b16 %v35
    %v314 = vunpack.c.l.b16 %v36
    %v315 = vunpack.c.l.b16 %v37
    %v316 = vunpack.c.l.b16 %v38
    %v317 = vunpack.c.l.b16 %v39
    %v318 = vunpack.c.l.b16 %v40
    %v319 = vunpack.c.l.b16 %v41
    %v320 = vunpack.c.l.b16 %v42
    %v321 = vunpack.c.l.b16 %v43
    %v322 = vunpack.c.l.b16 %v44
    %v323 = vunpack.c.l.b16 %v45
    %v324 = vunpack.c.l.b16 %v46
    %v325 = vunpack.c.l.b16 %v47
    %v326 = vunpack.c.l.b16 %v48
    %v327 = vunpack.c.l.b16 %v49
    %v328 = vunpack.c.l.b16 %v50
    %v329 = vunpack.c.l.b16 %v51
    %v330 = vunpack.c.l.b16 %v52
    %v331 = vunpack.c.l.b16 %v53
    %v332 = vunpack.c.l.b16 %v54
    %v333 = vunpack.c.l.b16 %v55
    %v334 = vunpack.c.l.b16 %v56
    %v335 = vunpack.c.l.b16 %v57
    %v336 = vunpack.c.l.b16 %v58
    %v337 = vunpack.c.l.b16 %v59
    %v338 = vunpack.c.l.b16 %v60
    %v339 = vunpack.c.l.b16 %v61
    %v340 = vunpack.c.l.b16 %v62
    %v341 = vunpack.c.l.b16 %v63
    %v342 = vunpack.c.l.b16 %v64
    %v343 = vunpack.c.l.b16 %v65
    %v344 = vunpack.c.l.b16 %v66
    %v345 = vunpack.c.l.b16 %v67
    %v346 = vunpack.c.l.b16 %v68
    %v347 = vunpack.c.l.b16 %v69
    %v348 = vunpack.c.l.b16 %v70
    %v349 = vunpack.c.l.b16 %v71
    %v350 = vunpack.c.l.b16 %v72
    %v351 = vunpack.c.l.b16 %v73
    %v352 = vunpack.c.l.b16 %v74
    %v353 = vunpack.c.l.b16 %v75
    %v354 = vunpack.c.l.b16 %v76
    %v355 = vunpack.c.l.b16 %v77
    %v356 = vunpack.c.l.b16 %v78
    %v357 = vunpack.c.l.b16 %v79
    %v358 = vunpack.c.l.b16 %v80
    %v359 = vunpack.c.l.b16 %v81
    %v360 = vunpack.c.l.b16 %v82
    %v361 = vunpack.c.l.b16 %v83
    %v362 = vunpack.c.l.b16 %v84
    %v363 = vunpack.c.l.b16 %v85
    %v364 = vunpack.c.l.b16 %v86
    %v365 = vunpack.c.l.b16 %v87
    %v366 = vunpack.c.l.b16 %v88
    %v367 = vunpack.c.l.b16 %v89
    %v368 = vunpack.c.l.b16 %v90
    %v369 = vunpack.c.l.b16 %v91
    %v370 = vunpack.c.l.b16 %v92
    %v371 = vunpack.c.l.b16 %v93
    %v372 = vunpack.c.l.b16 %v94
    %v373 = vunpack.c.l.b16 %v95
    %v374 = vunpack.c.l.b16 %v96
    %v375 = vunpack.c.l.b16 %v97
    %v376 = vunpack.c.l.b16 %v98
    %v377 = vunpack.c.l.b16 %v99
    %v378 = vunpack.c.l.b16 %v100
    %v379 = vunpack.c.l.b16 %v101
    %v380 = vunpack.c.l.b16 %v102
    %v381 = vunpack.c.l.b16 %v103
    %v382 = vunpack.c.l.b16 %v104
    %v383 = vunpack.c.l.b16 %v105
    %v384 = vunpack.c.l.b16 %v106
    %v385 = vunpack.c.l.b16 %v107
    %v386 = vunpack.c.l.b16 %v108
    %v387 = vunpack.c.l.b16 %v109
    %v388 = vunpack.c.l.b16 %v110
    %v389 = vunpack.c.l.b16 %v111
    %v390 = vunpack.c.l.b16 %v112
    %v391 = vunpack.c.l.b16 %v113
    %v392 = vunpack.c.l.b16 %v114
    %v393 = vunpack.c.l.b16 %v115
    %v394 = vunpack.c.l.b16 %v116
    %v395 = vunpack.c.l.b16 %v117
    %v396 = vunpack.c.l.b16 %v118
    %v397 = vunpack.c.l.b16 %v119
    %v398 = vunpack.c.l.b16 %v120
    %v399 = vunpack.c.l.b16 %v121
    %v400 = vunpack.c.l.b16 %v122
    %v401 = vunpack.c.l.b16 %v123
    %v402 = vunpack.c.l.b16 %v124
    %v403 = vunpack.c.l.b16 %v125
    %v404 = vunpack.c.l.b16 %v126
    %v405 = vunpack.c.l.b16 %v127
    %v406 = vunpack.c.l.b16 %v128
    %v407 = vunpack.c.l.b16 %v129
    %v408 = vunpack.c.l.b16 %v130
    %v409 = vunpack.c.l.b16 %v131
    %v410 = vunpack.c.l.b16 %v132
    %v411 = vunpack.c.l.b16 %v133
    %v412 = vunpack.c.l.b16 %v134
    %v413 = vunpack.c.l.b16 %v135
    %v414 = vunpack.c.l.b16 %v136
    %v415 = vunpack.c.l.b16 %v137
    %v416 = vunpack.c.l.b16 %v138
    %v417 = vunpack.c.l.b16 %v139
    %v418 = vunpack.c.l.b16 %v140
    %v419 = vunpack.c.l.b16 %v141
    %v420 = vunpack.c.l.b16 %v142
    %v421 = vunpack.c.l.b16 %v143
    %v422 = vunpack.c.l.b16 %v144
    %v423 = vunpack.c.l.b16 %v145
    %v424 = vunpack.c.l.b16 %v146
    %v425 = vunpack.c.l.b16 %v147
    %v426 = vunpack.c.l.b16 %v148
    %v427 = vunpack.c.l.b16 %v149
    %v428 = vunpack.c.l.b16 %v150
    %v429 = vunpack.c.l.b16 %v151
    %v430 = vunpack.c.l.b16 %v152
    %v431 = vunpack.c.l.b16 %v153
    %v432 = vunpack.c.l.b16 %v154
    %v433 = vunpack.c.l.b16 %v155
    %v434 = vunpack.c.l.b16 %v156
    %v435 = vpack.c.b16 %v308, %v307
    %v436 = vpack.c.b16 %v310, %v309
    %v437 = vpack.c.b16 %v312, %v311
    %v438 = vpack.c.b16 %v314, %v313
    %v439 = vpack.c.b16 %v316, %v315
    %v440 = vpack.c.b16 %v318, %v317
    %v441 = vpack.c.b16 %v320, %v319
    %v442 = vpack.c.b16 %v322, %v321
    %v443 = vpack.c.b16 %v324, %v323
    %v444 = vpack.c.b16 %v326, %v325
    %v445 = vpack.c.b16 %v328, %v327
    %v446 = vpack.c.b16 %v330, %v329
    %v447 = vpack.c.b16 %v332, %v331
    %v448 = vpack.c.b16 %v334, %v333
    %v449 = vpack.c.b16 %v336, %v335
    %v450 = vpack.c.b16 %v338, %v337
    %v451 = vpack.c.b16 %v340, %v339
    %v452 = vpack.c.b16 %v342, %v341
    %v453 = vpack.c.b16 %v344, %v343
    %v454 = vpack.c.b16 %v346, %v345
    %v455 = vpack.c.b16 %v348, %v347
    %v456 = vpack.c.b16 %v350, %v349
    %v457 = vpack.c.b16 %v352, %v351
    %v458 = vpack.c.b16 %v354, %v353
    %v459 = vpack.c.b16 %v356, %v355
    %v460 = vpack.c.b16 %v358, %v357
    %v461 = vpack.c.b16 %v360, %v359
    %v462 = vpack.c.b16 %v362, %v361
    %v463 = vpack.c.b16 %v364, %v363
    %v464 = vpack.c.b16 %v366, %v365
    %v465 = vpack.c.b16 %v368, %v367
    %v466 = vpack.c.b16 %v370, %v369
    %v467 = vpack.c.b16 %v372, %v371
    %v468 = vpack.c.b16 %v374, %v373
    %v469 = vpack.c.b16 %v376, %v375
    %v470 = vpack.c.b16 %v378, %v377
    %v471 = vpack.c.b16 %v380, %v379
    %v472 = vpack.c.b16 %v382, %v381
    %v473 = vpack.c.b16 %v384, %v383
    %v474 = vpack.c.b16 %v386, %v385
    %v475 = vpack.c.b16 %v388, %v387
    %v476 = vpack.c.b16 %v390, %v389
    %v477 = vpack.c.b16 %v392, %v391
    %v478 = vpack.c.b16 %v394, %v393
    %v479 = vpack.c.b16 %v396, %v395
    %v480 = vpack.c.b16 %v398, %v397
    %v481 = vpack.c.b16 %v400, %v399
    %v482 = vpack.c.b16 %v402, %v401
    %v483 = vpack.c.b16 %v404, %v403
    %v484 = vpack.c.b16 %v406, %v405
    %v485 = vpack.c.b16 %v408, %v407
    %v486 = vpack.c.b16 %v410, %v409
    %v487 = vpack.c.b16 %v412, %v411
    %v488 = vpack.c.b16 %v414, %v413
    %v489 = vpack.c.b16 %v416, %v415
    %v490 = vpack.c.b16 %v418, %v417
    %v491 = vpack.c.b16 %v420, %v419
    %v492 = vpack.c.b16 %v422, %v421
    %v493 = vpack.c.b16 %v424, %v423
    %v494 = vpack.c.b16 %v426, %v425
    %v495 = vpack.c.b16 %v428, %v427
    %v496 = vpack.c.b16 %v430, %v429
    %v497 = vpack.c.b16 %v432, %v431
    %v498 = vpack.c.b16 %v434, %v433
    %563 = vmatpush.bf16.msra.mxu0 %v442
    %564 = vmatpush.bf16.msra.mxu0 %v441
    %565 = vmatpush.bf16.msra.mxu0 %v440
    %566 = vmatpush.bf16.msra.mxu0 %v439
    %567 = vmatpush.bf16.msra.mxu0 %v438
    %568 = vmatpush.bf16.msra.mxu0 %v437
    %569 = vmatpush.bf16.msra.mxu0 %v436
    %570 = vmatpush.bf16.msra.mxu0 %v435
    %571 = vmatmul.bf16.gmra.mxu0 %v163
    %v572 = vpop.f32.mrf.mxu0
    %v573 = vadd.f32 %v157, %v572
    %v574 = vpop.f32.mrf.mxu0
    %575 = vdwg.mxu0
    %576 = vmatpush.bf16.msra.mxu0 %v450
    %577 = vmatpush.bf16.msra.mxu0 %v449
    %578 = vmatpush.bf16.msra.mxu0 %v448
    %579 = vmatpush.bf16.msra.mxu0 %v447
    %580 = vmatpush.bf16.msra.mxu0 %v446
    %581 = vmatpush.bf16.msra.mxu0 %v445
    %582 = vmatpush.bf16.msra.mxu0 %v444
    %583 = vmatpush.bf16.msra.mxu0 %v443
    %584 = vmatmul.bf16.gmra.mxu0 %v164
    %v585 = vpop.f32.mrf.mxu0
    %v586 = vadd.f32 %v573, %v585
    %v587 = vpop.f32.mrf.mxu0
    %588 = vdwg.mxu0
    %589 = vmatpush.bf16.msra.mxu0 %v458
    %590 = vmatpush.bf16.msra.mxu0 %v457
    %591 = vmatpush.bf16.msra.mxu0 %v456
    %592 = vmatpush.bf16.msra.mxu0 %v455
    %593 = vmatpush.bf16.msra.mxu0 %v454
    %594 = vmatpush.bf16.msra.mxu0 %v453
    %595 = vmatpush.bf16.msra.mxu0 %v452
    %596 = vmatpush.bf16.msra.mxu0 %v451
    %597 = vmatmul.bf16.gmra.mxu0 %v165
    %v598 = vpop.f32.mrf.mxu0
    %v599 = vadd.f32 %v586, %v598
    %v600 = vpop.f32.mrf.mxu0
    %601 = vdwg.mxu0
    %602 = vmatpush.bf16.msra.mxu0 %v466
    %603 = vmatpush.bf16.msra.mxu0 %v465
    %604 = vmatpush.bf16.msra.mxu0 %v464
    %605 = vmatpush.bf16.msra.mxu0 %v463
    %606 = vmatpush.bf16.msra.mxu0 %v462
    %607 = vmatpush.bf16.msra.mxu0 %v461
    %608 = vmatpush.bf16.msra.mxu0 %v460
    %609 = vmatpush.bf16.msra.mxu0 %v459
    %610 = vmatmul.bf16.gmra.mxu0 %v166
    %v611 = vpop.f32.mrf.mxu0
    %v612 = vadd.f32 %v599, %v611
    %v613 = vpop.f32.mrf.mxu0
    %614 = vdwg.mxu0
    %615 = vmatpush.bf16.msra.mxu0 %v474
    %616 = vmatpush.bf16.msra.mxu0 %v473
    %617 = vmatpush.bf16.msra.mxu0 %v472
    %618 = vmatpush.bf16.msra.mxu0 %v471
    %619 = vmatpush.bf16.msra.mxu0 %v470
    %620 = vmatpush.bf16.msra.mxu0 %v469
    %621 = vmatpush.bf16.msra.mxu0 %v468
    %622 = vmatpush.bf16.msra.mxu0 %v467
    %623 = vmatmul.bf16.gmra.mxu0 %v167
    %v624 = vpop.f32.mrf.mxu0
    %v625 = vadd.f32 %v612, %v624
    %v626 = vpop.f32.mrf.mxu0
    %627 = vdwg.mxu0
    %628 = vmatpush.bf16.msra.mxu0 %v482
    %629 = vmatpush.bf16.msra.mxu0 %v481
    %630 = vmatpush.bf16.msra.mxu0 %v480
    %631 = vmatpush.bf16.msra.mxu0 %v479
    %632 = vmatpush.bf16.msra.mxu0 %v478
    %633 = vmatpush.bf16.msra.mxu0 %v477
    %634 = vmatpush.bf16.msra.mxu0 %v476
    %635 = vmatpush.bf16.msra.mxu0 %v475
    %636 = vmatmul.bf16.gmra.mxu0 %v168
    %v637 = vpop.f32.mrf.mxu0
    %v638 = vadd.f32 %v625, %v637
    %v639 = vpop.f32.mrf.mxu0
    %640 = vdwg.mxu0
    %641 = vmatpush.bf16.msra.mxu0 %v490
    %642 = vmatpush.bf16.msra.mxu0 %v489
    %643 = vmatpush.bf16.msra.mxu0 %v488
    %644 = vmatpush.bf16.msra.mxu0 %v487
    %645 = vmatpush.bf16.msra.mxu0 %v486
    %646 = vmatpush.bf16.msra.mxu0 %v485
    %647 = vmatpush.bf16.msra.mxu0 %v484
    %648 = vmatpush.bf16.msra.mxu0 %v483
    %649 = vmatmul.bf16.gmra.mxu0 %v169
    %v650 = vpop.f32.mrf.mxu0
    %v651 = vadd.f32 %v638, %v650
    %v652 = vpop.f32.mrf.mxu0
    %653 = vdwg.mxu0
    %654 = vmatpush.bf16.msra.mxu0 %v498
    %655 = vmatpush.bf16.msra.mxu0 %v497
    %656 = vmatpush.bf16.msra.mxu0 %v496
    %657 = vmatpush.bf16.msra.mxu0 %v495
    %658 = vmatpush.bf16.msra.mxu0 %v494
    %659 = vmatpush.bf16.msra.mxu0 %v493
    %660 = vmatpush.bf16.msra.mxu0 %v492
    %661 = vmatpush.bf16.msra.mxu0 %v491
    %662 = vmatmul.bf16.gmra.mxu0 %v170
    %v663 = vpop.f32.mrf.mxu0
    %v664 = vadd.f32 %v651, %v663
    %v665 = vpop.f32.mrf.mxu0
    %666 = vdwg.mxu0
    %v667 = vmax.f32 %v664, 0.0
    %v668 = vpack.c.bf16 %v667, %v667
    %v669 = vld [vmem:[%s3] sm:$0xff]
    %v670 = vld [vmem:[%s3 + $0x8] sm:$0xff]
    %v671 = vld [vmem:[%s3 + $0x10] sm:$0xff]
    %v672 = vld [vmem:[%s3 + $0x18] sm:$0xff]
    %v673 = vld [vmem:[%s3 + $0x20] sm:$0xff]
    %v674 = vld [vmem:[%s3 + $0x28] sm:$0xff]
    %v675 = vld [vmem:[%s3 + $0x30] sm:$0xff]
    %v676 = vld [vmem:[%s3 + $0x38] sm:$0xff]
    %v678 = vrot.slane %v668, 1
    %v683 = vunpack.c.l.b16 %v673
    %v684 = vunpack.c.h.b16 %v673
    %v685 = vunpack.c.l.b16 %v674
    %v686 = vunpack.c.h.b16 %v674
    %v687 = vunpack.c.l.b16 %v675
    %v688 = vunpack.c.h.b16 %v675
    %v689 = vunpack.c.l.b16 %v676
    %v690 = vunpack.c.h.b16 %v676
    %v691 = vpack.c.b16 %v685, %v683
    %v692 = vpack.c.b16 %v686, %v684
    %v693 = vpack.c.b16 %v689, %v687
    %v694 = vpack.c.b16 %v690, %v688
    %vm699 = vcmask 261120
    %v701 = vsel %vm699, %v678, 0
    %703 = vmatpush.bf16.msra.mxu0 0
    %704 = vmatpush.bf16.msra.mxu0 0
    %705 = vmatpush.bf16.msra.mxu0 0
    %706 = vmatpush.bf16.msra.mxu0 0
    %707 = vmatpush.bf16.msra.mxu0 0
    %708 = vmatpush.bf16.msra.mxu0 0
    %709 = vmatpush.bf16.msra.mxu0 %v693
    %710 = vmatpush.bf16.msra.mxu0 %v691
    %711 = vmatmul.bf16.gmra.mxu0 %v701
    %v712 = vpop.f32.mrf.mxu0
    %v713 = vadd.f32 0.0, %v712
    %v714 = vpop.f32.mrf.mxu0
    %715 = vdwg.mxu0
    %716 = vmatpush.bf16.msra.mxu0 0
    %717 = vmatpush.bf16.msra.mxu0 0
    %718 = vmatpush.bf16.msra.mxu0 0
    %719 = vmatpush.bf16.msra.mxu0 0
    %720 = vmatpush.bf16.msra.mxu0 0
    %721 = vmatpush.bf16.msra.mxu0 0
    %722 = vmatpush.bf16.msra.mxu0 %v694
    %723 = vmatpush.bf16.msra.mxu0 %v692
    %724 = vmatmul.bf16.gmra.mxu0 %v701
    %v725 = vpop.f32.mrf.mxu0
    %v726 = vadd.f32 0.0, %v725
    %v727 = vpop.f32.mrf.mxu0
    %728 = vdwg.mxu0
    %v733 = vunpack.c.l.b16 %v669
    %v734 = vunpack.c.h.b16 %v669
    %v735 = vunpack.c.l.b16 %v670
    %v736 = vunpack.c.h.b16 %v670
    %v737 = vunpack.c.l.b16 %v671
    %v738 = vunpack.c.h.b16 %v671
    %v739 = vunpack.c.l.b16 %v672
    %v740 = vunpack.c.h.b16 %v672
    %v741 = vpack.c.b16 %v735, %v733
    %v742 = vpack.c.b16 %v736, %v734
    %v743 = vpack.c.b16 %v739, %v737
    %v744 = vpack.c.b16 %v740, %v738
    %v750 = vsel %vm699, %v668, 0
    %752 = vmatpush.bf16.msra.mxu0 0
    %753 = vmatpush.bf16.msra.mxu0 0
    %754 = vmatpush.bf16.msra.mxu0 0
    %755 = vmatpush.bf16.msra.mxu0 0
    %756 = vmatpush.bf16.msra.mxu0 0
    %757 = vmatpush.bf16.msra.mxu0 0
    %758 = vmatpush.bf16.msra.mxu0 %v743
    %759 = vmatpush.bf16.msra.mxu0 %v741
    %760 = vmatmul.bf16.gmra.mxu0 %v750
    %v761 = vpop.f32.mrf.mxu0
    %v762 = vadd.f32 %v713, %v761
    %v763 = vpop.f32.mrf.mxu0
    %764 = vdwg.mxu0
    %765 = vmatpush.bf16.msra.mxu0 0
    %766 = vmatpush.bf16.msra.mxu0 0
    %767 = vmatpush.bf16.msra.mxu0 0
    %768 = vmatpush.bf16.msra.mxu0 0
    %769 = vmatpush.bf16.msra.mxu0 0
    %770 = vmatpush.bf16.msra.mxu0 0
    %771 = vmatpush.bf16.msra.mxu0 %v744
    %772 = vmatpush.bf16.msra.mxu0 %v742
    %773 = vmatmul.bf16.gmra.mxu0 %v750
    %v774 = vpop.f32.mrf.mxu0
    %v775 = vadd.f32 %v726, %v774
    %v776 = vpop.f32.mrf.mxu0
    %777 = vdwg.mxu0
    %v778 = vperm.slane %v25, 1
    %v779 = vperm.slane %v26, 1
    %v780 = vadd.f32 %v762, %v778
    %v781 = vadd.f32 %v775, %v779
    %v782 = vmax.f32 %v780, 0.0
    %v783 = vmax.f32 %v781, 0.0
    %v784 = vlaneseq
    %v785 = vand.u32 %v784, 127
    %v786 = vld [vmem:[%s1] sm:$0x3]
    %787 = vset.pattern.permute.xlu0 0
    %788 = vperm.xlu0 %787, %v786
    %v789 = vpop.permute.xlu0 %788
    %vm790 = vcmp.eq.s32.totalorder %v785, %v789
    %v791 = vsel %vm790, 1, 0
    %v792 = vcvt.s32.f32 %v791
    %v793 = vpack.c.bf16 %v792, %v792
    %v794 = vld [vmem:[%s3 + $0x40] sm:$0xff]
    %v795 = vld [vmem:[%s3 + $0x48] sm:$0xff]
    %v796 = vld [vmem:[%s3 + $0x50] sm:$0xff]
    %v797 = vld [vmem:[%s3 + $0x58] sm:$0xff]
    %v798 = vld [vmem:[%s3 + $0x60] sm:$0x77]
    %v800 = vunpack.c.l.b16 %v798
    %v801 = vunpack.c.h.b16 %v798
    %v802 = vpack.c.b16 %v800, %v800
    %v803 = vpack.c.b16 %v801, %v801
    %vm804 = vcmask 48128
    %v806 = vsel %vm804, %v793, 0
    %vm808 = vcmask 1042432
    %v810 = vsel %vm808, %v802, 0
    %v813 = vsel %vm808, %v803, 0
    %815 = vmatpush.bf16.msra.mxu0 0
    %816 = vmatpush.bf16.msra.mxu0 0
    %817 = vmatpush.bf16.msra.mxu0 0
    %818 = vmatpush.bf16.msra.mxu0 0
    %819 = vmatpush.bf16.msra.mxu0 0
    %820 = vmatpush.bf16.msra.mxu0 0
    %821 = vmatpush.bf16.msra.mxu0 0
    %822 = vmatpush.bf16.msra.mxu0 %v810
    %823 = vmatmul.bf16.gmra.mxu0 %v806
    %v824 = vpop.f32.mrf.mxu0
    %v825 = vadd.f32 0.0, %v824
    %v826 = vpop.f32.mrf.mxu0
    %827 = vdwg.mxu0
    %828 = vmatpush.bf16.msra.mxu0 0
    %829 = vmatpush.bf16.msra.mxu0 0
    %830 = vmatpush.bf16.msra.mxu0 0
    %831 = vmatpush.bf16.msra.mxu0 0
    %832 = vmatpush.bf16.msra.mxu0 0
    %833 = vmatpush.bf16.msra.mxu0 0
    %834 = vmatpush.bf16.msra.mxu0 0
    %835 = vmatpush.bf16.msra.mxu0 %v813
    %836 = vmatmul.bf16.gmra.mxu0 %v806
    %v837 = vpop.f32.mrf.mxu0
    %v838 = vadd.f32 0.0, %v837
    %v839 = vpop.f32.mrf.mxu0
    %840 = vdwg.mxu0
    %v845 = vunpack.c.l.b16 %v794
    %v846 = vunpack.c.h.b16 %v794
    %v847 = vunpack.c.l.b16 %v795
    %v848 = vunpack.c.h.b16 %v795
    %v849 = vunpack.c.l.b16 %v796
    %v850 = vunpack.c.h.b16 %v796
    %v851 = vunpack.c.l.b16 %v797
    %v852 = vunpack.c.h.b16 %v797
    %v853 = vpack.c.b16 %v847, %v845
    %v854 = vpack.c.b16 %v848, %v846
    %v855 = vpack.c.b16 %v851, %v849
    %v856 = vpack.c.b16 %v852, %v850
    %861 = vmatpush.bf16.msra.mxu0 0
    %862 = vmatpush.bf16.msra.mxu0 0
    %863 = vmatpush.bf16.msra.mxu0 0
    %864 = vmatpush.bf16.msra.mxu0 0
    %865 = vmatpush.bf16.msra.mxu0 0
    %866 = vmatpush.bf16.msra.mxu0 0
    %867 = vmatpush.bf16.msra.mxu0 %v855
    %868 = vmatpush.bf16.msra.mxu0 %v853
    %869 = vmatmul.bf16.gmra.mxu0 %v701
    %v870 = vpop.f32.mrf.mxu0
    %v871 = vadd.f32 %v825, %v870
    %v872 = vpop.f32.mrf.mxu0
    %873 = vdwg.mxu0
    %874 = vmatpush.bf16.msra.mxu0 0
    %875 = vmatpush.bf16.msra.mxu0 0
    %876 = vmatpush.bf16.msra.mxu0 0
    %877 = vmatpush.bf16.msra.mxu0 0
    %878 = vmatpush.bf16.msra.mxu0 0
    %879 = vmatpush.bf16.msra.mxu0 0
    %880 = vmatpush.bf16.msra.mxu0 %v856
    %881 = vmatpush.bf16.msra.mxu0 %v854
    %882 = vmatmul.bf16.gmra.mxu0 %v701
    %v883 = vpop.f32.mrf.mxu0
    %v884 = vadd.f32 %v838, %v883
    %v885 = vpop.f32.mrf.mxu0
    %886 = vdwg.mxu0
    %v887 = vperm.slane %v25, 3
    %v888 = vperm.slane %v26, 3
    %v889 = vadd.f32 %v871, %v887
    %v890 = vadd.f32 %v884, %v888
    %v891 = vmax.f32 %v889, 0.0
    %v892 = vmax.f32 %v890, 0.0
    %v895 = vrot.slane %v891, 6
    %v896 = vrot.slane %v892, 6
    %vm899 = vcmask 1041408
    %v900 = vsel %vm899, %v782, %v895
    %v901 = vsel %vm899, %v783, %v896
    %v902 = vpack.c.bf16 %v900, %v900
    %v903 = vpack.c.bf16 %v901, %v901
    %v904 = vld [vmem:[%s4] sm:$0xf]
    %v905 = vld [vmem:[%s4 + $0x4] sm:$0xf]
    %v906 = vld [vmem:[%s4 + $0x8] sm:$0xf]
    %v907 = vld [vmem:[%s4 + $0xc] sm:$0xf]
    %v908 = vld [vmem:[%s4 + $0x10] sm:$0xf]
    %v909 = vld [vmem:[%s4 + $0x14] sm:$0xf]
    %v910 = vld [vmem:[%s4 + $0x18] sm:$0xf]
    %v911 = vld [vmem:[%s4 + $0x1c] sm:$0xf]
    %v912 = vld [vmem:[%s4 + $0x20] sm:$0xf]
    %v913 = vld [vmem:[%s4 + $0x24] sm:$0xf]
    %v914 = vld [vmem:[%s4 + $0x28] sm:$0xf]
    %v915 = vld [vmem:[%s4 + $0x2c] sm:$0xf]
    %v916 = vld [vmem:[%s4 + $0x30] sm:$0xf]
    %v917 = vld [vmem:[%s4 + $0x34] sm:$0xf]
    %v918 = vld [vmem:[%s4 + $0x38] sm:$0xf]
    %v919 = vld [vmem:[%s4 + $0x3c] sm:$0xf]
    %v920 = vld [vmem:[%s4 + $0x40] sm:$0xf]
    %v921 = vld [vmem:[%s4 + $0x44] sm:$0xf]
    %v922 = vld [vmem:[%s4 + $0x48] sm:$0xf]
    %v923 = vld [vmem:[%s4 + $0x4c] sm:$0xf]
    %v924 = vld [vmem:[%s4 + $0x50] sm:$0xf]
    %v925 = vld [vmem:[%s4 + $0x54] sm:$0xf]
    %v926 = vld [vmem:[%s4 + $0x58] sm:$0xf]
    %v927 = vld [vmem:[%s4 + $0x5c] sm:$0xf]
    %v928 = vld [vmem:[%s4 + $0x60] sm:$0xf]
    %v929 = vld [vmem:[%s4 + $0x64] sm:$0xf]
    %v930 = vld [vmem:[%s4 + $0x68] sm:$0xf]
    %v931 = vld [vmem:[%s4 + $0x6c] sm:$0xf]
    %v932 = vld [vmem:[%s4 + $0x70] sm:$0xf]
    %v933 = vld [vmem:[%s4 + $0x74] sm:$0xf]
    %v934 = vld [vmem:[%s4 + $0x78] sm:$0xf]
    %v935 = vld [vmem:[%s4 + $0x7c] sm:$0xf]
    %v968 = vunpack.c.l.b16 %v904
    %v969 = vunpack.c.l.b16 %v905
    %v970 = vunpack.c.l.b16 %v906
    %v971 = vunpack.c.l.b16 %v907
    %v972 = vunpack.c.l.b16 %v908
    %v973 = vunpack.c.l.b16 %v909
    %v974 = vunpack.c.l.b16 %v910
    %v975 = vunpack.c.l.b16 %v911
    %v976 = vunpack.c.l.b16 %v912
    %v977 = vunpack.c.l.b16 %v913
    %v978 = vunpack.c.l.b16 %v914
    %v979 = vunpack.c.l.b16 %v915
    %v980 = vunpack.c.l.b16 %v916
    %v981 = vunpack.c.l.b16 %v917
    %v982 = vunpack.c.l.b16 %v918
    %v983 = vunpack.c.l.b16 %v919
    %v984 = vunpack.c.l.b16 %v920
    %v985 = vunpack.c.l.b16 %v921
    %v986 = vunpack.c.l.b16 %v922
    %v987 = vunpack.c.l.b16 %v923
    %v988 = vunpack.c.l.b16 %v924
    %v989 = vunpack.c.l.b16 %v925
    %v990 = vunpack.c.l.b16 %v926
    %v991 = vunpack.c.l.b16 %v927
    %v992 = vunpack.c.l.b16 %v928
    %v993 = vunpack.c.l.b16 %v929
    %v994 = vunpack.c.l.b16 %v930
    %v995 = vunpack.c.l.b16 %v931
    %v996 = vunpack.c.l.b16 %v932
    %v997 = vunpack.c.l.b16 %v933
    %v998 = vunpack.c.l.b16 %v934
    %v999 = vunpack.c.l.b16 %v935
    %v1000 = vpack.c.b16 %v969, %v968
    %v1001 = vpack.c.b16 %v971, %v970
    %v1002 = vpack.c.b16 %v973, %v972
    %v1003 = vpack.c.b16 %v975, %v974
    %v1004 = vpack.c.b16 %v977, %v976
    %v1005 = vpack.c.b16 %v979, %v978
    %v1006 = vpack.c.b16 %v981, %v980
    %v1007 = vpack.c.b16 %v983, %v982
    %v1008 = vpack.c.b16 %v985, %v984
    %v1009 = vpack.c.b16 %v987, %v986
    %v1010 = vpack.c.b16 %v989, %v988
    %v1011 = vpack.c.b16 %v991, %v990
    %v1012 = vpack.c.b16 %v993, %v992
    %v1013 = vpack.c.b16 %v995, %v994
    %v1014 = vpack.c.b16 %v997, %v996
    %v1015 = vpack.c.b16 %v999, %v998
    %1032 = vmatpush.bf16.msra.mxu0 %v1007
    %1033 = vmatpush.bf16.msra.mxu0 %v1006
    %1034 = vmatpush.bf16.msra.mxu0 %v1005
    %1035 = vmatpush.bf16.msra.mxu0 %v1004
    %1036 = vmatpush.bf16.msra.mxu0 %v1003
    %1037 = vmatpush.bf16.msra.mxu0 %v1002
    %1038 = vmatpush.bf16.msra.mxu0 %v1001
    %1039 = vmatpush.bf16.msra.mxu0 %v1000
    %1040 = vmatmul.bf16.gmra.mxu0 %v902
    %v1041 = vpop.f32.mrf.mxu0
    %v1042 = vadd.f32 0.0, %v1041
    %v1043 = vpop.f32.mrf.mxu0
    %1044 = vdwg.mxu0
    %1045 = vmatpush.bf16.msra.mxu0 %v1015
    %1046 = vmatpush.bf16.msra.mxu0 %v1014
    %1047 = vmatpush.bf16.msra.mxu0 %v1013
    %1048 = vmatpush.bf16.msra.mxu0 %v1012
    %1049 = vmatpush.bf16.msra.mxu0 %v1011
    %1050 = vmatpush.bf16.msra.mxu0 %v1010
    %1051 = vmatpush.bf16.msra.mxu0 %v1009
    %1052 = vmatpush.bf16.msra.mxu0 %v1008
    %1053 = vmatmul.bf16.gmra.mxu0 %v903
    %v1054 = vpop.f32.mrf.mxu0
    %v1055 = vadd.f32 %v1042, %v1054
    %v1056 = vpop.f32.mrf.mxu0
    %1057 = vdwg.mxu0
    %v1058 = vperm.slane %v25, 2
    %1060 = vrot.lane.b32.xlu0 %v1058, 32
    %v1061 = vpop.permute.xlu0 %1060
    %v1063 = vadd.f32 %v1055, %v1061
    %v1064 = vperm.slane %v25, 4
    %v1065 = vadd.f32 %v1055, %v1064
    %1067 = vrot.lane.b32.xlu0 %v1063, 96
    %v1068 = vpop.permute.xlu0 %1067
    %vm1070 = vcmask 41984
    %1071 = vst.msk [vmem:[#allocation2] sm:$0x3] %vm1070, %v1068
    %1073 = vst.sshfl [vmem:[#allocation1] sm:$0xff pattern:$0x73625140] %v1065
    %s1074 = scalar_lea.vmem [#allocation1], 1
    %v1075 = vld [vmem:[%s1074] ss:$4 sm:$0xff]
    %vm1077 = vcmask 254976
    %1078 = vst.msk [vmem:[#allocation2 + $0x2] sm:$0x3] %vm1077, %v1075
    %1080 = vst.sshfl [vmem:[#allocation1] sm:$0xff pattern:$0x73625140] %v667
    %s1081 = scalar_lea.vmem [#allocation1], 1
    %v1082 = vld [vmem:[%s1081] ss:$4 sm:$0xff]
    %1083 = vrot.lane.b32.xlu0 %v1082, 32
    %v1084 = vpop.permute.xlu0 %1083
    %vm1086 = vcmask 517376
    %1087 = vst.msk [vmem:[#allocation2 + $0x2] sm:$0x3] %vm1086, %v1084
    // Predicated region
    $region26: #{tpu_custom_call.1} parent=1 // pred_check
      _
    $region27: #{tpu_custom_call.1} parent=1 // pred_check_branch
      %1089 = sbr.rel (0) target = $region29
    $region28: #{tpu_custom_call.1} parent=1 // pred_region
      %1091 = vsyncadd [#allocation3], 0
      %s1093 = sshll.u32 [#allocation2], 4
      %s1094 = int_to_ptr.vmem [resolvable:$true] %s1093
      %s1095 = sshll.u32 %s6, 4
      %s1096 = int_to_ptr.hbm [resolvable:$true] %s1095
      %1098 = dma.vmem_to_hbm [thread:$0]  %s1094, 64, %s1096, [#allocation3]
    $region29: #{tpu_custom_call.1} parent=1 // pred_fallthru
      _
    // Predicated region
    $region30: #{tpu_custom_call.1} parent=1 // pred_check
      _
    $region31: #{tpu_custom_call.1} parent=1 // pred_check_branch
      %1100 = sbr.rel (0) target = $region33
    $region32: #{tpu_custom_call.1} parent=1 // pred_region
      %1102 = dma.done [#allocation3], 64
    $region33: #{tpu_custom_call.1} parent=1 // pred_fallthru
      _
    %1103 = vsyncpa [#allocation3], 1

</llo_original>
